<compile_context>
chip_gen: v5e
topology: v5e:2x2
jax: 0.10.0
libtpu: 0.0.40
codegen_flags: <defaults>
</compile_context>

<pallas_src>
import math

import jax
import jax.numpy as jnp
from jax.experimental import pallas as pl
from jax.experimental.pallas import tpu as pltpu


_LANES = 512          # lane-dense last dim (multiple of 128 -> unmasked vst)
_TILE_ROWS = 1024     # rows per grid step; 1024x512xf32 = 2 MiB per buffer
_SCALE = 180.0 / math.pi


def rad2deg_kernel(x_ref, o_ref):
    # Single fused multiply per element.  Upcast to f32 in-register (free
    # relative to the DMA), scale, and cast back to the output dtype so
    # sub-32-bit inputs keep their narrow width through HBM.
    x = x_ref[...]
    o_ref[...] = (x.astype(jnp.float32) * jnp.float32(_SCALE)).astype(o_ref.dtype)


def _dim_semantics():
    # v7x has 2 TensorCores per chip: CORE_PARALLEL lets both issue DMA.
    # On 1-TC chips (v5e/v6e) plain "parallel" is used.
    try:
        kind = jax.devices()[0].device_kind.lower()
    except Exception:
        kind = ""
    if "v7" in kind:
        core_parallel = getattr(pltpu, "CORE_PARALLEL", None)
        if core_parallel is not None:
            return (core_parallel,)
    return ("parallel",)


def _rad2deg_blocks(flat2d):
    """Runs the kernel over a (rows, _LANES) slab, dtype preserved."""
    rows, lanes = flat2d.shape
    # Block equal to the full row extent for small inputs (waives the /8 rule);
    # otherwise a multiple-of-8 tile with a cdiv grid (partial last block is
    # handled by Pallas boundary masking).
    tile_rows = min(_TILE_ROWS, rows)
    grid = (pl.cdiv(rows, tile_rows),)
    return pl.pallas_call(
        rad2deg_kernel,
        out_shape=jax.ShapeDtypeStruct((rows, lanes), flat2d.dtype),
        grid=grid,
        in_specs=[pl.BlockSpec((tile_rows, lanes), lambda i: (i, 0))],
        out_specs=pl.BlockSpec((tile_rows, lanes), lambda i: (i, 0)),
        compiler_params=pltpu.CompilerParams(
            dimension_semantics=_dim_semantics(),
        ),
    )(flat2d)


def rad2deg(x):
    """Converts angles from radians to degrees (arbitrary input shape)."""
    orig_shape = x.shape
    n = x.size
    if n == 0:
        return x

    flat = x.reshape(-1)                     # free layout-preserving reshape
    bulk = (n // _LANES) * _LANES

    if bulk == n:
        # Common case: size is a multiple of 512 -> no pad, no slice, no cast.
        return _rad2deg_blocks(flat.reshape(-1, _LANES)).reshape(orig_shape)

    # Rare unaligned case: kernel on the 512-aligned bulk, tiny jnp op on the
    # <512-element tail (avoids padding/slicing the whole tensor).
    pieces = []
    if bulk > 0:
        pieces.append(_rad2deg_blocks(flat[:bulk].reshape(-1, _LANES)).reshape(-1))
    tail = flat[bulk:]
    pieces.append((tail.astype(jnp.float32) * jnp.float32(_SCALE)).astype(tail.dtype))
    return jnp.concatenate(pieces).reshape(orig_shape)


def rad2deg_reference(x):
    # Pure-JAX reference matching torch: 180.0 * tensor / pi
    return (x.astype(jnp.float32) * 180.0 / jnp.float32(math.pi)).astype(x.dtype)


if __name__ == "__main__":
    key = jax.random.PRNGKey(0)
    # Tensor of arbitrary shape; angles in [0, pi) like the docstring example.
    x = jnp.float32(math.pi) * jax.random.uniform(
        key, (2, 4, 16, 16), dtype=jnp.float32
    )

    fwd = jax.jit(rad2deg)
    out = jax.block_until_ready(fwd(x))

    ref = jax.block_until_ready(rad2deg_reference(x))
    assert out.shape == x.shape
    assert out.dtype == x.dtype
    assert jnp.allclose(out, ref, atol=1e-4, rtol=1e-5), float(
        jnp.max(jnp.abs(out - ref))
    )

    print("KERNEL_OK")
</pallas_src>

<mosaic_0001>
module attributes {stable_mosaic.version = 11 : i64} {
  func.func @rad2deg_kernel(%arg0: i32, %arg1: memref<4x512xf32, #tpu.memory_space<vmem>>, %arg2: memref<4x512xf32, #tpu.memory_space<vmem>>) attributes {dimension_semantics = [#tpu.dimension_semantics<parallel>], iteration_bounds = array<i64: 1>, scalar_prefetch = 0 : i64, scratch_operands = 0 : i64, tpu.core_type = #tpu.core_type<tc>, window_params = [{transform_indices = @transform_0, window_bounds = array<i64: 4, 512>}, {transform_indices = @transform_1, window_bounds = array<i64: 4, 512>}]} {
    %c0 = arith.constant 0 : index
    %c0_0 = arith.constant 0 : index
    %0 = vector.load %arg1[%c0, %c0_0] : memref<4x512xf32, #tpu.memory_space<vmem>>, vector<4x512xf32>
    %cst = arith.constant 57.2957802 : f32
    %1 = vector.broadcast %cst : f32 to vector<4x512xf32>
    %2 = arith.mulf %0, %1 : vector<4x512xf32>
    %c0_1 = arith.constant 0 : index
    %c0_2 = arith.constant 0 : index
    %3 = vector.load %arg2[%c0_1, %c0_2] : memref<4x512xf32, #tpu.memory_space<vmem>>, vector<4x512xf32>
    tpu.vector_store %arg2[%c0_1, %c0_2], %2 {strides = array<i32>} : memref<4x512xf32, #tpu.memory_space<vmem>>, vector<4x512xf32>,
    return
  }
  func.func @transform_0(%arg0: i32) -> (i32, i32) {
    %c0_i32 = arith.constant 0 : i32
    %c0_i32_0 = arith.constant 0 : i32
    return %arg0, %c0_i32 : i32, i32
  }
  func.func @transform_1(%arg0: i32) -> (i32, i32) {
    %c0_i32 = arith.constant 0 : i32
    %c0_i32_0 = arith.constant 0 : i32
    return %arg0, %c0_i32 : i32, i32
  }
}

</mosaic_0001>

<llo_original>
// kernel: rad2deg.1
$region0: #{rad2deg.1}
  #allocation0 [shape = 'u32[]', space=smem, size = 0x4, offset = 0x4, fixed_abs, tag = 'smem constant byte address 0x4 - core index']
  #allocation1 [shape = 'u32[72,128]{1,0:T(1,128)}', space=vmem, size = 0x9000, scoped, tag = 'internal scratch']
  %s0 = inlined_call_operand.vmem [shape: f32[4,512], index: 0, kind: input, shape index: {}]
  %s1 = inlined_call_operand.vmem [shape: f32[4,512], index: 1, kind: output, shape index: {}]
  %s2 = sld [smem:[#allocation0]]
  $region14: #{rad2deg.1} parent=0
    _
  %s4 = ssub.s32 1, %s2
  %s5 = scalar_select 0, %s4, %s2
  // Predicated region
  $region2: #{rad2deg.1} parent=0 // pred_check
    _
  $region3: #{rad2deg.1} parent=0 // pred_check_branch
    %7 = sbr.rel (0) target = $region5
  $region4: #{rad2deg.1} parent=0 // pred_region
    _
  $region5: #{rad2deg.1} parent=0 // pred_fallthru
    _
  %v8 = vld [vmem:[%s0] sm:$0xff]
  %v9 = vld [vmem:[%s0 + $0x8] sm:$0xff]
  %v10 = vmul.f32 %v8, 57.29578
  %v11 = vmul.f32 %v9, 57.29578
  %12 = vst [vmem:[%s1] sm:$0xff] %v10
  %13 = vst [vmem:[%s1 + $0x8] sm:$0xff] %v11
  // Predicated region
  $region6: #{rad2deg.1} parent=0 // pred_check
    _
  $region7: #{rad2deg.1} parent=0 // pred_check_branch
    %15 = sbr.rel (0) target = $region9
  $region8: #{rad2deg.1} parent=0 // pred_region
    _
  $region9: #{rad2deg.1} parent=0 // pred_fallthru
    _
  // Predicated region
  $region10: #{rad2deg.1} parent=0 // pred_check
    _
  $region11: #{rad2deg.1} parent=0 // pred_check_branch
    %17 = sbr.rel (0) target = $region13
  $region12: #{rad2deg.1} parent=0 // pred_region
    _
  $region13: #{rad2deg.1} parent=0 // pred_fallthru
    _

</llo_original>
